<compile_context>
chip_gen: v7x
topology: tpu7x:2x2x1
jax: 0.10.0
libtpu: 0.0.40
codegen_flags: <defaults>
</compile_context>

<pallas_src>
import functools

import jax
import jax.numpy as jnp
from jax.experimental import pallas as pl
from jax.experimental.pallas import tpu as pltpu


def _round_up(n, m):
    return ((n + m - 1) // m) * m


def _stable_softplus(x):
    # numerically stable softplus: max(x,0) + log1p(exp(-|x|))
    return jnp.maximum(x, 0.0) + jnp.log1p(jnp.exp(-jnp.abs(x)))


def gaussian_encoder_kernel(
    xe_ref, w1_ref, b1_ref, w2_ref, b2_ref, whead_ref, bhead_ref,
    z_ref, mu_ref, var_ref, logq_ref, *, x_dim, z_dim,
):
    xe = xe_ref[...]
    x = xe[:, :x_dim]
    eps = xe[:, x_dim:]

    # encoder: LinearMap — two linear_block(Linear, ReLU) stages
    h = jnp.dot(x, w1_ref[...], preferred_element_type=jnp.float32) + b1_ref[...]
    h = jnp.maximum(h, 0.0)
    h = jnp.dot(h, w2_ref[...], preferred_element_type=jnp.float32) + b2_ref[...]
    h = jnp.maximum(h, 0.0)

    # fused mu/var heads: one [h1, 2*z_dim] matmul, then slice
    head = jnp.dot(h, whead_ref[...], preferred_element_type=jnp.float32) + bhead_ref[...]
    mu = head[:, :z_dim]
    var = _stable_softplus(head[:, z_dim:]) + 1e-5

    # reparameterization
    z = mu + eps * jnp.sqrt(var)

    # diagonal Gaussian log-density of z under N(mu, var), summed over features.
    # (z - mu)^2 / var == eps^2 exactly by construction; log(2*pi) term hoisted
    # out of the per-element sum.
    log2pi = jnp.float32(1.8378770664093453)  # log(2*pi)
    logq = -0.5 * (
        jnp.float32(z_dim) * log2pi
        + jnp.sum(jnp.log(var) + eps * eps, axis=-1, keepdims=True)
    )

    # direct narrow stores (no packed slab, no zero padding)
    z_ref[...] = z
    mu_ref[...] = mu
    var_ref[...] = var
    logq_ref[...] = logq


def gaussian_stochastic_encoder(x, params, eps, *, batch_tile=4096):
    """x: [B, x_dim] float32, eps: [B, z_dim] float32.
    Returns (z, mu, var, log_q) with shapes ([B,z], [B,z], [B,z], [B,1])."""
    B, x_dim = x.shape
    h0 = params["w1"].shape[1]
    h1 = params["w2"].shape[1]
    z_dim = params["wmu"].shape[1]

    # Fuse the two tiny head matmuls into one (wrapper-side, one-time concat).
    whead = jnp.concatenate([params["wmu"], params["wvar"]], axis=1)   # [h1, 2*z]
    bhead = jnp.concatenate([params["bmu"], params["bvar"]], axis=1)   # [1, 2*z]

    # Single batch-tiled input stream: [x | eps] -> one DMA per step instead of two.
    xe = jnp.concatenate([x, eps], axis=1)                              # [B, x_dim + z_dim]

    # Batch tile: large (amortize per-step overhead), rows a multiple of 8,
    # and keep >= 2 grid blocks when the batch allows it (v7x megacore sharding).
    tb = min(batch_tile, _round_up(B, 8))
    if pl.cdiv(B, tb) < 2 and B > 8:
        tb = _round_up(pl.cdiv(B, 2), 8)
    n_blocks = pl.cdiv(B, tb)
    B_pad = n_blocks * tb
    if B_pad != B:
        # Padded rows run the MLP on zeros (bias only); var >= 1e-5 keeps all ops
        # finite and the rows are sliced off below.
        xe = jnp.pad(xe, ((0, B_pad - B), (0, 0)))

    row = lambda i: (i, 0)     # batch-tiled operands
    const = lambda i: (0, 0)   # VMEM-resident weights/biases (same block every step)

    useful_io_bytes = 4 * (
        B_pad * (x_dim + z_dim)                       # input reads
        + B_pad * (3 * z_dim + 1)                     # output writes
        + x_dim * h0 + h0 * h1 + h1 * 2 * z_dim       # weights
        + h0 + h1 + 2 * z_dim                         # biases
    )
    cost = pl.CostEstimate(
        flops=2 * B_pad * (x_dim * h0 + h0 * h1 + h1 * 2 * z_dim),
        transcendentals=4 * B_pad * z_dim,            # exp, log1p, log, sqrt per element
        bytes_accessed=useful_io_bytes,
    )

    z, mu, var, logq = pl.pallas_call(
        functools.partial(gaussian_encoder_kernel, x_dim=x_dim, z_dim=z_dim),
        out_shape=(
            jax.ShapeDtypeStruct((B_pad, z_dim), jnp.float32),   # z
            jax.ShapeDtypeStruct((B_pad, z_dim), jnp.float32),   # mu
            jax.ShapeDtypeStruct((B_pad, z_dim), jnp.float32),   # var
            jax.ShapeDtypeStruct((B_pad, 1), jnp.float32),       # log q(z|x)
        ),
        grid=(n_blocks,),
        in_specs=[
            pl.BlockSpec((tb, x_dim + z_dim), row),   # [x | eps]
            pl.BlockSpec((x_dim, h0), const),         # w1
            pl.BlockSpec((1, h0), const),             # b1
            pl.BlockSpec((h0, h1), const),            # w2
            pl.BlockSpec((1, h1), const),             # b2
            pl.BlockSpec((h1, 2 * z_dim), const),     # whead (wmu|wvar)
            pl.BlockSpec((1, 2 * z_dim), const),      # bhead (bmu|bvar)
        ],
        out_specs=[
            pl.BlockSpec((tb, z_dim), row),
            pl.BlockSpec((tb, z_dim), row),
            pl.BlockSpec((tb, z_dim), row),
            pl.BlockSpec((tb, 1), row),
        ],
        compiler_params=pltpu.CompilerParams(
            dimension_semantics=("parallel",),        # shard batch grid across TCs (v7x)
            vmem_limit_bytes=48 * 1024 * 1024,        # under v7x's 64 MiB physical VMEM
        ),
        cost_estimate=cost,
    )(xe, params["w1"], params["b1"], params["w2"], params["b2"], whead, bhead)

    # Drop batch padding only; no lane re-slicing needed anymore.
    return z[:B], mu[:B], var[:B], logq[:B]


def init_params(key, x_dim, hidden_dims, z_dim):
    """Deterministic PyTorch-Linear-style init (uniform +-1/sqrt(fan_in)).
    hidden_dims = [h0, h1]: encoder = Linear(x_dim,h0)+ReLU, Linear(h0,h1)+ReLU."""
    h0, h1 = hidden_dims
    keys = jax.random.split(key, 8)

    def lin(kw, kb, fan_in, fan_out):
        bound = 1.0 / jnp.sqrt(jnp.float32(fan_in))
        w = jax.random.uniform(kw, (fan_in, fan_out), jnp.float32, -bound, bound)
        b = jax.random.uniform(kb, (1, fan_out), jnp.float32, -bound, bound)
        return w, b

    w1, b1 = lin(keys[0], keys[1], x_dim, h0)
    w2, b2 = lin(keys[2], keys[3], h0, h1)
    wmu, bmu = lin(keys[4], keys[5], h1, z_dim)
    wvar, bvar = lin(keys[6], keys[7], h1, z_dim)
    return dict(w1=w1, b1=b1, w2=w2, b2=b2,
                wmu=wmu, bmu=bmu, wvar=wvar, bvar=bvar)


def reference(x, params, eps):
    h = jnp.maximum(x @ params["w1"] + params["b1"], 0.0)
    h = jnp.maximum(h @ params["w2"] + params["b2"], 0.0)
    mu = h @ params["wmu"] + params["bmu"]
    var = jax.nn.softplus(h @ params["wvar"] + params["bvar"]) + 1e-5
    z = mu + eps * jnp.sqrt(var)
    logq = jnp.sum(
        -0.5 * (jnp.log(2 * jnp.pi) + jnp.log(var) + (z - mu) ** 2 / var),
        axis=-1, keepdims=True,
    )
    return z, mu, var, logq


if __name__ == "__main__":
    B, x_dim, z_dim = 8, 16, 8
    hidden_dims = [32, 32]  # -> encoder hidden [32], encoder output 32

    key = jax.random.PRNGKey(0)
    k_x, k_p, k_eps = jax.random.split(key, 3)

    x = jax.random.normal(k_x, (B, x_dim), jnp.float32)
    params = init_params(k_p, x_dim, hidden_dims, z_dim)
    eps = jax.random.normal(k_eps, (B, z_dim), jnp.float32)  # torch.randn equivalent

    z, mu, var, logq = jax.block_until_ready(
        gaussian_stochastic_encoder(x, params, eps)
    )

    # correctness check vs plain-JAX reference
    z_r, mu_r, var_r, logq_r = reference(x, params, eps)
    assert jnp.allclose(z, z_r, atol=1e-5), "z mismatch"
    assert jnp.allclose(mu, mu_r, atol=1e-5), "mu mismatch"
    assert jnp.allclose(var, var_r, atol=1e-5), "var mismatch"
    assert jnp.allclose(logq, logq_r, atol=1e-4), "logq mismatch"

    print("KERNEL_OK")
</pallas_src>

<mosaic_0001>
module attributes {stable_mosaic.version = 11 : i64} {
  func.func @gaussian_encoder_kernel(%arg0: i32, %arg1: memref<8x24xf32, #tpu.memory_space<vmem>>, %arg2: memref<16x32xf32, #tpu.memory_space<vmem>>, %arg3: memref<1x32xf32, #tpu.memory_space<vmem>>, %arg4: memref<32x32xf32, #tpu.memory_space<vmem>>, %arg5: memref<1x32xf32, #tpu.memory_space<vmem>>, %arg6: memref<32x16xf32, #tpu.memory_space<vmem>>, %arg7: memref<1x16xf32, #tpu.memory_space<vmem>>, %arg8: memref<8x8xf32, #tpu.memory_space<vmem>>, %arg9: memref<8x8xf32, #tpu.memory_space<vmem>>, %arg10: memref<8x8xf32, #tpu.memory_space<vmem>>, %arg11: memref<8x1xf32, #tpu.memory_space<vmem>>) attributes {dimension_semantics = [#tpu.dimension_semantics<parallel>], iteration_bounds = array<i64: 1>, scalar_prefetch = 0 : i64, scratch_operands = 0 : i64, tpu.core_type = #tpu.core_type<tc>, window_params = [{transform_indices = @transform_0, window_bounds = array<i64: 8, 24>}, {pipeline_mode = #tpu.pipeline_mode<synchronous>, transform_indices = @transform_1, window_bounds = array<i64: 16, 32>}, {pipeline_mode = #tpu.pipeline_mode<synchronous>, transform_indices = @transform_2, window_bounds = array<i64: 1, 32>}, {pipeline_mode = #tpu.pipeline_mode<synchronous>, transform_indices = @transform_3, window_bounds = array<i64: 32, 32>}, {pipeline_mode = #tpu.pipeline_mode<synchronous>, transform_indices = @transform_4, window_bounds = array<i64: 1, 32>}, {pipeline_mode = #tpu.pipeline_mode<synchronous>, transform_indices = @transform_5, window_bounds = array<i64: 32, 16>}, {pipeline_mode = #tpu.pipeline_mode<synchronous>, transform_indices = @transform_6, window_bounds = array<i64: 1, 16>}, {transform_indices = @transform_7, window_bounds = array<i64: 8, 8>}, {transform_indices = @transform_8, window_bounds = array<i64: 8, 8>}, {transform_indices = @transform_9, window_bounds = array<i64: 8, 8>}, {transform_indices = @transform_10, window_bounds = array<i64: 8, 1>}]} {
    %c0 = arith.constant 0 : index
    %c0_0 = arith.constant 0 : index
    %0 = vector.load %arg1[%c0, %c0_0] : memref<8x24xf32, #tpu.memory_space<vmem>>, vector<8x24xf32>
    %1 = vector.extract_strided_slice %0 {offsets = [0, 0], sizes = [8, 16], strides = [1, 1]} : vector<8x24xf32> to vector<8x16xf32>
    %2 = vector.extract_strided_slice %0 {offsets = [0, 16], sizes = [8, 8], strides = [1, 1]} : vector<8x24xf32> to vector<8x8xf32>
    %c0_1 = arith.constant 0 : index
    %c0_2 = arith.constant 0 : index
    %3 = vector.load %arg2[%c0_1, %c0_2] : memref<16x32xf32, #tpu.memory_space<vmem>>, vector<16x32xf32>
    %cst = arith.constant dense<0.000000e+00> : vector<8x32xf32>
    %4 = tpu.matmul %1, %3, %cst {dimension_numbers = #tpu.dot_dimension_numbers<[1], [0], [0], [1], [0, 0, 1, 1], [], []>} : vector<8x16xf32>, vector<16x32xf32>, vector<8x32xf32> -> vector<8x32xf32>
    %c0_3 = arith.constant 0 : index
    %c0_4 = arith.constant 0 : index
    %5 = vector.load %arg3[%c0_3, %c0_4] : memref<1x32xf32, #tpu.memory_space<vmem>>, vector<1x32xf32>
    %6 = vector.broadcast %5 : vector<1x32xf32> to vector<8x32xf32>
    %7 = arith.addf %4, %6 : vector<8x32xf32>
    %cst_5 = arith.constant 0.000000e+00 : f32
    %8 = vector.broadcast %cst_5 : f32 to vector<8x32xf32>
    %9 = arith.maximumf %7, %8 : vector<8x32xf32>
    %c0_6 = arith.constant 0 : index
    %c0_7 = arith.constant 0 : index
    %10 = vector.load %arg4[%c0_6, %c0_7] : memref<32x32xf32, #tpu.memory_space<vmem>>, vector<32x32xf32>
    %cst_8 = arith.constant dense<0.000000e+00> : vector<8x32xf32>
    %11 = tpu.matmul %9, %10, %cst_8 {dimension_numbers = #tpu.dot_dimension_numbers<[1], [0], [0], [1], [0, 0, 1, 1], [], []>} : vector<8x32xf32>, vector<32x32xf32>, vector<8x32xf32> -> vector<8x32xf32>
    %c0_9 = arith.constant 0 : index
    %c0_10 = arith.constant 0 : index
    %12 = vector.load %arg5[%c0_9, %c0_10] : memref<1x32xf32, #tpu.memory_space<vmem>>, vector<1x32xf32>
    %13 = vector.broadcast %12 : vector<1x32xf32> to vector<8x32xf32>
    %14 = arith.addf %11, %13 : vector<8x32xf32>
    %cst_11 = arith.constant 0.000000e+00 : f32
    %15 = vector.broadcast %cst_11 : f32 to vector<8x32xf32>
    %16 = arith.maximumf %14, %15 : vector<8x32xf32>
    %c0_12 = arith.constant 0 : index
    %c0_13 = arith.constant 0 : index
    %17 = vector.load %arg6[%c0_12, %c0_13] : memref<32x16xf32, #tpu.memory_space<vmem>>, vector<32x16xf32>
    %cst_14 = arith.constant dense<0.000000e+00> : vector<8x16xf32>
    %18 = tpu.matmul %16, %17, %cst_14 {dimension_numbers = #tpu.dot_dimension_numbers<[1], [0], [0], [1], [0, 0, 1, 1], [], []>} : vector<8x32xf32>, vector<32x16xf32>, vector<8x16xf32> -> vector<8x16xf32>
    %c0_15 = arith.constant 0 : index
    %c0_16 = arith.constant 0 : index
    %19 = vector.load %arg7[%c0_15, %c0_16] : memref<1x16xf32, #tpu.memory_space<vmem>>, vector<1x16xf32>
    %20 = vector.broadcast %19 : vector<1x16xf32> to vector<8x16xf32>
    %21 = arith.addf %18, %20 : vector<8x16xf32>
    %22 = vector.extract_strided_slice %21 {offsets = [0, 0], sizes = [8, 8], strides = [1, 1]} : vector<8x16xf32> to vector<8x8xf32>
    %23 = vector.extract_strided_slice %21 {offsets = [0, 8], sizes = [8, 8], strides = [1, 1]} : vector<8x16xf32> to vector<8x8xf32>
    %cst_17 = arith.constant 0.000000e+00 : f32
    %24 = vector.broadcast %cst_17 : f32 to vector<8x8xf32>
    %25 = arith.maximumf %23, %24 : vector<8x8xf32>
    %26 = math.absf %23 : vector<8x8xf32>
    %cst_18 = arith.constant 0.000000e+00 : f32
    %27 = vector.broadcast %cst_18 : f32 to vector<8x8xf32>
    %28 = arith.subf %27, %26 : vector<8x8xf32>
    %29 = math.exp %28 : vector<8x8xf32>
    %30 = math.log1p %29 : vector<8x8xf32>
    %31 = arith.addf %25, %30 : vector<8x8xf32>
    %cst_19 = arith.constant 9.99999974E-6 : f32
    %32 = vector.broadcast %cst_19 : f32 to vector<8x8xf32>
    %33 = arith.addf %31, %32 : vector<8x8xf32>
    %34 = math.sqrt %33 : vector<8x8xf32>
    %35 = arith.mulf %2, %34 : vector<8x8xf32>
    %36 = arith.addf %22, %35 : vector<8x8xf32>
    %cst_20 = arith.constant 8.000000e+00 : f32
    %cst_21 = arith.constant 1.83787704 : f32
    %37 = arith.mulf %cst_20, %cst_21 : f32
    %38 = math.log %33 : vector<8x8xf32>
    %39 = arith.mulf %2, %2 : vector<8x8xf32>
    %40 = arith.addf %38, %39 : vector<8x8xf32>
    %cst_22 = arith.constant dense<0.000000e+00> : vector<8xf32>
    %41 = vector.multi_reduction <add>, %40, %cst_22 [1] : vector<8x8xf32> to vector<8xf32>
    %42 = vector.shape_cast %41 : vector<8xf32> to vector<8x1xf32>
    %43 = vector.broadcast %37 : f32 to vector<8x1xf32>
    %44 = arith.addf %43, %42 : vector<8x1xf32>
    %cst_23 = arith.constant -5.000000e-01 : f32
    %45 = vector.broadcast %cst_23 : f32 to vector<8x1xf32>
    %46 = arith.mulf %45, %44 : vector<8x1xf32>
    %c0_24 = arith.constant 0 : index
    %c0_25 = arith.constant 0 : index
    %47 = vector.load %arg8[%c0_24, %c0_25] : memref<8x8xf32, #tpu.memory_space<vmem>>, vector<8x8xf32>
    tpu.vector_store %arg8[%c0_24, %c0_25], %36 {strides = array<i32>} : memref<8x8xf32, #tpu.memory_space<vmem>>, vector<8x8xf32>,
    %c0_26 = arith.constant 0 : index
    %c0_27 = arith.constant 0 : index
    %48 = vector.load %arg9[%c0_26, %c0_27] : memref<8x8xf32, #tpu.memory_space<vmem>>, vector<8x8xf32>
    tpu.vector_store %arg9[%c0_26, %c0_27], %22 {strides = array<i32>} : memref<8x8xf32, #tpu.memory_space<vmem>>, vector<8x8xf32>,
    %c0_28 = arith.constant 0 : index
    %c0_29 = arith.constant 0 : index
    %49 = vector.load %arg10[%c0_28, %c0_29] : memref<8x8xf32, #tpu.memory_space<vmem>>, vector<8x8xf32>
    tpu.vector_store %arg10[%c0_28, %c0_29], %33 {strides = array<i32>} : memref<8x8xf32, #tpu.memory_space<vmem>>, vector<8x8xf32>,
    %c0_30 = arith.constant 0 : index
    %c0_31 = arith.constant 0 : index
    %50 = vector.load %arg11[%c0_30, %c0_31] : memref<8x1xf32, #tpu.memory_space<vmem>>, vector<8x1xf32>
    tpu.vector_store %arg11[%c0_30, %c0_31], %46 {strides = array<i32>} : memref<8x1xf32, #tpu.memory_space<vmem>>, vector<8x1xf32>,
    return
  }
  func.func @transform_0(%arg0: i32) -> (i32, i32) {
    %c0_i32 = arith.constant 0 : i32
    %c0_i32_0 = arith.constant 0 : i32
    return %arg0, %c0_i32 : i32, i32
  }
  func.func @transform_1(%arg0: i32) -> (i32, i32) {
    %c0_i32 = arith.constant 0 : i32
    %c0_i32_0 = arith.constant 0 : i32
    %c0_i32_1 = arith.constant 0 : i32
    return %c0_i32, %c0_i32_0 : i32, i32
  }
  func.func @transform_2(%arg0: i32) -> (i32, i32) {
    %c0_i32 = arith.constant 0 : i32
    %c0_i32_0 = arith.constant 0 : i32
    %c0_i32_1 = arith.constant 0 : i32
    return %c0_i32, %c0_i32_0 : i32, i32
  }
  func.func @transform_3(%arg0: i32) -> (i32, i32) {
    %c0_i32 = arith.constant 0 : i32
    %c0_i32_0 = arith.constant 0 : i32
    %c0_i32_1 = arith.constant 0 : i32
    return %c0_i32, %c0_i32_0 : i32, i32
  }
  func.func @transform_4(%arg0: i32) -> (i32, i32) {
    %c0_i32 = arith.constant 0 : i32
    %c0_i32_0 = arith.constant 0 : i32
    %c0_i32_1 = arith.constant 0 : i32
    return %c0_i32, %c0_i32_0 : i32, i32
  }
  func.func @transform_5(%arg0: i32) -> (i32, i32) {
    %c0_i32 = arith.constant 0 : i32
    %c0_i32_0 = arith.constant 0 : i32
    %c0_i32_1 = arith.constant 0 : i32
    return %c0_i32, %c0_i32_0 : i32, i32
  }
  func.func @transform_6(%arg0: i32) -> (i32, i32) {
    %c0_i32 = arith.constant 0 : i32
    %c0_i32_0 = arith.constant 0 : i32
    %c0_i32_1 = arith.constant 0 : i32
    return %c0_i32, %c0_i32_0 : i32, i32
  }
  func.func @transform_7(%arg0: i32) -> (i32, i32) {
    %c0_i32 = arith.constant 0 : i32
    %c0_i32_0 = arith.constant 0 : i32
    return %arg0, %c0_i32 : i32, i32
  }
  func.func @transform_8(%arg0: i32) -> (i32, i32) {
    %c0_i32 = arith.constant 0 : i32
    %c0_i32_0 = arith.constant 0 : i32
    return %arg0, %c0_i32 : i32, i32
  }
  func.func @transform_9(%arg0: i32) -> (i32, i32) {
    %c0_i32 = arith.constant 0 : i32
    %c0_i32_0 = arith.constant 0 : i32
    return %arg0, %c0_i32 : i32, i32
  }
  func.func @transform_10(%arg0: i32) -> (i32, i32) {
    %c0_i32 = arith.constant 0 : i32
    %c0_i32_0 = arith.constant 0 : i32
    return %arg0, %c0_i32 : i32, i32
  }
}

</mosaic_0001>

<llo_original>
// kernel: tpu_custom_call.1
$region0: #{tpu_custom_call.1}
  #allocation0 [shape = 'u32[]', space=smem, size = 0x4, offset = 0x4, fixed_abs, tag = 'smem constant byte address 0x4 - core index']
  #allocation1 [shape = 'u32[144,128]{1,0:T(1,128)}', space=vmem, size = 0x12000, scoped, tag = 'internal scratch']
  %s0 = inlined_call_operand.hbm [shape: f32[8,24], index: 0, kind: input, shape index: {}]
  %s1 = inlined_call_operand.vmem [shape: f32[16,32], index: 1, kind: input, shape index: {}]
  %s2 = inlined_call_operand.vmem [shape: f32[1,32], index: 2, kind: input, shape index: {}]
  %s3 = inlined_call_operand.vmem [shape: f32[32,32], index: 3, kind: input, shape index: {}]
  %s4 = inlined_call_operand.vmem [shape: f32[1,32], index: 4, kind: input, shape index: {}]
  %s5 = inlined_call_operand.vmem [shape: f32[32,16], index: 5, kind: input, shape index: {}]
  %s6 = inlined_call_operand.vmem [shape: f32[1,16], index: 6, kind: input, shape index: {}]
  %s7 = inlined_call_operand.hbm [shape: f32[8,8], index: 7, kind: output, shape index: {0}]
  %s8 = inlined_call_operand.hbm [shape: f32[8,8], index: 8, kind: output, shape index: {1}]
  %s9 = inlined_call_operand.hbm [shape: f32[8,8], index: 9, kind: output, shape index: {2}]
  %s10 = inlined_call_operand.vmem [shape: f32[8,1], index: 10, kind: output, shape index: {3}]
  %11 = xla_tuple %s7, %s8, %s9, %s10
  %s12 = sld [smem:[#allocation0]]
  $region66: #{tpu_custom_call.1} parent=0
    _
  %s14 = ssub.s32 1, %s12
  %s15 = scalar_select 0, %s14, %s12
  $region1: #{tpu_custom_call.1} parent=0
    #allocation2 [shape = 'u8[4096]{0}', space=vmem, size = 0x1000, scoped, tag = 'input window, operand 0, single buffered']
    #allocation3 [shape = 's32[1]{0}', space=sflag, size = 0x4, scoped, tag = 'scoped memory for tpu_custom_call.1']
    #allocation4 [shape = 's32[1]{0}', space=sflag, size = 0x4, scoped, tag = 'scoped memory for tpu_custom_call.1']
    #allocation5 [shape = 'u8[4096]{0}', space=vmem, size = 0x1000, scoped, tag = 'output window, operand 0, single buffered']
    #allocation6 [shape = 'u8[4096]{0}', space=vmem, size = 0x1000, scoped, tag = 'output window, operand 1, single buffered']
    #allocation7 [shape = 's32[1]{0}', space=sflag, size = 0x4, scoped, tag = 'scoped memory for tpu_custom_call.1']
    #allocation8 [shape = 'u8[4096]{0}', space=vmem, size = 0x1000, scoped, tag = 'output window, operand 2, single buffered']
    %16 = vsyncpa [#allocation3], 0
    %17 = vsyncpa [#allocation4], 0
    %18 = vsyncpa [#allocation7], 0
    // Predicated region
    $region2: #{tpu_custom_call.1} parent=1 // pred_check
      _
    $region3: #{tpu_custom_call.1} parent=1 // pred_check_branch
      %20 = sbr.rel (0) target = $region5
    $region4: #{tpu_custom_call.1} parent=1 // pred_region
      %s22 = ssub.s32 128, 128
      %23 = vsyncadd [#allocation3], %s22
      %s25 = sshll.u32 [#allocation2], 4
      %s26 = int_to_ptr.vmem [resolvable:$true] %s25
      %28 = dma.hbm_to_vmem [thread:$0]  %s0, 128, %s26, [#allocation3]
    $region5: #{tpu_custom_call.1} parent=1 // pred_fallthru
      _
    // Predicated region
    $region6: #{tpu_custom_call.1} parent=1 // pred_check
      _
    $region7: #{tpu_custom_call.1} parent=1 // pred_check_branch
      %30 = sbr.rel (0) target = $region9
    $region8: #{tpu_custom_call.1} parent=1 // pred_region
      _
    $region9: #{tpu_custom_call.1} parent=1 // pred_fallthru
      _
    // Predicated region
    $region10: #{tpu_custom_call.1} parent=1 // pred_check
      _
    $region11: #{tpu_custom_call.1} parent=1 // pred_check_branch
      %32 = sbr.rel (0) target = $region13
    $region12: #{tpu_custom_call.1} parent=1 // pred_region
      _
    $region13: #{tpu_custom_call.1} parent=1 // pred_fallthru
      _
    // Predicated region
    $region14: #{tpu_custom_call.1} parent=1 // pred_check
      _
    $region15: #{tpu_custom_call.1} parent=1 // pred_check_branch
      %34 = sbr.rel (0) target = $region17
    $region16: #{tpu_custom_call.1} parent=1 // pred_region
      _
    $region17: #{tpu_custom_call.1} parent=1 // pred_fallthru
      _
    // Predicated region
    $region18: #{tpu_custom_call.1} parent=1 // pred_check
      _
    $region19: #{tpu_custom_call.1} parent=1 // pred_check_branch
      %36 = sbr.rel (0) target = $region21
    $region20: #{tpu_custom_call.1} parent=1 // pred_region
      _
    $region21: #{tpu_custom_call.1} parent=1 // pred_fallthru
      _
    // Predicated region
    $region22: #{tpu_custom_call.1} parent=1 // pred_check
      _
    $region23: #{tpu_custom_call.1} parent=1 // pred_check_branch
      %38 = sbr.rel (0) target = $region25
    $region24: #{tpu_custom_call.1} parent=1 // pred_region
      _
    $region25: #{tpu_custom_call.1} parent=1 // pred_fallthru
      _
    // Predicated region
    $region26: #{tpu_custom_call.1} parent=1 // pred_check
      _
    $region27: #{tpu_custom_call.1} parent=1 // pred_check_branch
      %40 = sbr.rel (0) target = $region29
    $region28: #{tpu_custom_call.1} parent=1 // pred_region
      _
    $region29: #{tpu_custom_call.1} parent=1 // pred_fallthru
      _
    // Predicated region
    $region30: #{tpu_custom_call.1} parent=1 // pred_check
      _
    $region31: #{tpu_custom_call.1} parent=1 // pred_check_branch
      %42 = sbr.rel (0) target = $region33
    $region32: #{tpu_custom_call.1} parent=1 // pred_region
      %43 = dma.done [#allocation3], 128
    $region33: #{tpu_custom_call.1} parent=1 // pred_fallthru
      _
    %v44 = vld [vmem:[#allocation2] sm:$0xff]
    %v45 = vld [vmem:[%s1] sm:$0xff]
    %v46 = vld [vmem:[%s1 + $0x8] sm:$0xff]
    %v47 = vld [vmem:[%s2] sm:$0x1]
    %v49 = vlaneseq
    %v50 = vshrl.u32 %v49, 7
    %v51 = vsub.s32 0, %v50
    %v52 = vrot.slane %v47, %v51
    %vm54 = vcmask 130048
    %v56 = vsel %vm54, %v44, 0
    %58 = vmatprep.subr.mxu0 0.0
    %59 = vmatpush1.msra.mxu0 %v45
    %60 = vmatprep.subr.mxu0 0.0
    %61 = vmatpush1.msra.mxu0 %v46
    %62 = vmatprep.subr.mxu0 0.0
    %63 = vmatpush1.msra.mxu0 0.0
    %64 = vmatprep.subr.mxu0 0.0
    %65 = vmatpush1.msra.mxu0 0.0
    %66 = vmatprep.subr.mxu0 0.0
    %67 = vmatpush1.msra.mxu0 0.0
    %68 = vmatprep.subr.mxu0 0.0
    %69 = vmatpush1.msra.mxu0 0.0
    %70 = vmatprep.subr.mxu0 0.0
    %71 = vmatpush1.msra.mxu0 0.0
    %72 = vmatprep.subr.mxu0 0.0
    %73 = vmatpush1.msra.mxu0 0.0
    %74 = vmatprep.subr.mxu0 0.0
    %75 = vmatpush1.msra.mxu0 0.0
    %76 = vmatprep.subr.mxu0 0.0
    %77 = vmatpush1.msra.mxu0 0.0
    %78 = vmatprep.subr.mxu0 0.0
    %79 = vmatpush1.msra.mxu0 0.0
    %80 = vmatprep.subr.mxu0 0.0
    %81 = vmatpush1.msra.mxu0 0.0
    %82 = vmatprep.subr.mxu0 0.0
    %83 = vmatpush1.msra.mxu0 0.0
    %84 = vmatprep.subr.mxu0 0.0
    %85 = vmatpush1.msra.mxu0 0.0
    %86 = vmatprep.subr.mxu0 0.0
    %87 = vmatpush1.msra.mxu0 0.0
    %88 = vmatprep.subr.mxu0 0.0
    %89 = vmatpush1.msra.mxu0 0.0
    %90 = vmatprep.subr.mxu0 0.0
    %91 = vmatpush1.msra.mxu0 0.0
    %92 = vmatprep.subr.mxu0 0.0
    %93 = vmatpush1.msra.mxu0 0.0
    %94 = vmatprep.subr.mxu0 0.0
    %95 = vmatpush1.msra.mxu0 0.0
    %96 = vmatprep.subr.mxu0 0.0
    %97 = vmatpush1.msra.mxu0 0.0
    %98 = vmatprep.subr.mxu0 0.0
    %99 = vmatpush1.msra.mxu0 0.0
    %100 = vmatprep.subr.mxu0 0.0
    %101 = vmatpush1.msra.mxu0 0.0
    %102 = vmatprep.subr.mxu0 0.0
    %103 = vmatpush1.msra.mxu0 0.0
    %104 = vmatprep.subr.mxu0 0.0
    %105 = vmatpush1.msra.mxu0 0.0
    %106 = vmatprep.subr.mxu0 0.0
    %107 = vmatpush1.msra.mxu0 0.0
    %108 = vmatprep.subr.mxu0 0.0
    %109 = vmatpush1.msra.mxu0 0.0
    %110 = vmatprep.subr.mxu0 0.0
    %111 = vmatpush1.msra.mxu0 0.0
    %112 = vmatprep.subr.mxu0 0.0
    %113 = vmatpush1.msra.mxu0 0.0
    %114 = vmatprep.subr.mxu0 0.0
    %115 = vmatpush1.msra.mxu0 0.0
    %116 = vmatprep.subr.mxu0 0.0
    %117 = vmatpush1.msra.mxu0 0.0
    %118 = vmatprep.subr.mxu0 0.0
    %119 = vmatpush1.msra.mxu0 0.0
    %120 = vmatprep.subr.mxu0 0.0
    %121 = vmatpush1.msra.mxu0 0.0
    %122 = vmatprep.mubr.f32.mxu0 0.0
    %123 = vmatmul.mubr.f32.gmra.mrb[0].mxu0 %v56
    %v124 = vpop.f32.mrb[0].mxu0
    %v125 = vadd.f32 %v52, %v124
    %v126 = vpop.f32.mrb[0].mxu0
    %127 = vdwg.mxu0
    %v128 = vmax.f32 %v125, 0.0
    %v129 = vld [vmem:[%s3] sm:$0xff]
    %v130 = vld [vmem:[%s3 + $0x8] sm:$0xff]
    %v131 = vld [vmem:[%s3 + $0x10] sm:$0xff]
    %v132 = vld [vmem:[%s3 + $0x18] sm:$0xff]
    %v133 = vld [vmem:[%s4] sm:$0x1]
    %v135 = vlaneseq
    %v136 = vshrl.u32 %v135, 7
    %v137 = vsub.s32 0, %v136
    %v138 = vrot.slane %v133, %v137
    %vm140 = vcmask 261120
    %v142 = vsel %vm140, %v128, 0
    %144 = vmatprep.subr.mxu0 0.0
    %145 = vmatpush1.msra.mxu0 %v129
    %146 = vmatprep.subr.mxu0 0.0
    %147 = vmatpush1.msra.mxu0 %v130
    %148 = vmatprep.subr.mxu0 0.0
    %149 = vmatpush1.msra.mxu0 %v131
    %150 = vmatprep.subr.mxu0 0.0
    %151 = vmatpush1.msra.mxu0 %v132
    %152 = vmatprep.subr.mxu0 0.0
    %153 = vmatpush1.msra.mxu0 0.0
    %154 = vmatprep.subr.mxu0 0.0
    %155 = vmatpush1.msra.mxu0 0.0
    %156 = vmatprep.subr.mxu0 0.0
    %157 = vmatpush1.msra.mxu0 0.0
    %158 = vmatprep.subr.mxu0 0.0
    %159 = vmatpush1.msra.mxu0 0.0
    %160 = vmatprep.subr.mxu0 0.0
    %161 = vmatpush1.msra.mxu0 0.0
    %162 = vmatprep.subr.mxu0 0.0
    %163 = vmatpush1.msra.mxu0 0.0
    %164 = vmatprep.subr.mxu0 0.0
    %165 = vmatpush1.msra.mxu0 0.0
    %166 = vmatprep.subr.mxu0 0.0
    %167 = vmatpush1.msra.mxu0 0.0
    %168 = vmatprep.subr.mxu0 0.0
    %169 = vmatpush1.msra.mxu0 0.0
    %170 = vmatprep.subr.mxu0 0.0
    %171 = vmatpush1.msra.mxu0 0.0
    %172 = vmatprep.subr.mxu0 0.0
    %173 = vmatpush1.msra.mxu0 0.0
    %174 = vmatprep.subr.mxu0 0.0
    %175 = vmatpush1.msra.mxu0 0.0
    %176 = vmatprep.subr.mxu0 0.0
    %177 = vmatpush1.msra.mxu0 0.0
    %178 = vmatprep.subr.mxu0 0.0
    %179 = vmatpush1.msra.mxu0 0.0
    %180 = vmatprep.subr.mxu0 0.0
    %181 = vmatpush1.msra.mxu0 0.0
    %182 = vmatprep.subr.mxu0 0.0
    %183 = vmatpush1.msra.mxu0 0.0
    %184 = vmatprep.subr.mxu0 0.0
    %185 = vmatpush1.msra.mxu0 0.0
    %186 = vmatprep.subr.mxu0 0.0
    %187 = vmatpush1.msra.mxu0 0.0
    %188 = vmatprep.subr.mxu0 0.0
    %189 = vmatpush1.msra.mxu0 0.0
    %190 = vmatprep.subr.mxu0 0.0
    %191 = vmatpush1.msra.mxu0 0.0
    %192 = vmatprep.subr.mxu0 0.0
    %193 = vmatpush1.msra.mxu0 0.0
    %194 = vmatprep.subr.mxu0 0.0
    %195 = vmatpush1.msra.mxu0 0.0
    %196 = vmatprep.subr.mxu0 0.0
    %197 = vmatpush1.msra.mxu0 0.0
    %198 = vmatprep.subr.mxu0 0.0
    %199 = vmatpush1.msra.mxu0 0.0
    %200 = vmatprep.subr.mxu0 0.0
    %201 = vmatpush1.msra.mxu0 0.0
    %202 = vmatprep.subr.mxu0 0.0
    %203 = vmatpush1.msra.mxu0 0.0
    %204 = vmatprep.subr.mxu0 0.0
    %205 = vmatpush1.msra.mxu0 0.0
    %206 = vmatprep.subr.mxu0 0.0
    %207 = vmatpush1.msra.mxu0 0.0
    %208 = vmatprep.mubr.f32.mxu0 0.0
    %209 = vmatmul.mubr.f32.gmra.mrb[0].mxu0 %v142
    %v210 = vpop.f32.mrb[0].mxu0
    %v211 = vadd.f32 %v138, %v210
    %v212 = vpop.f32.mrb[0].mxu0
    %213 = vdwg.mxu0
    %v214 = vmax.f32 %v211, 0.0
    %v215 = vld [vmem:[%s5] sm:$0xff]
    %v216 = vld [vmem:[%s5 + $0x8] sm:$0xff]
    %v217 = vld [vmem:[%s5 + $0x10] sm:$0xff]
    %v218 = vld [vmem:[%s5 + $0x18] sm:$0xff]
    %v219 = vld [vmem:[%s6] sm:$0x1]
    %v221 = vlaneseq
    %v222 = vshrl.u32 %v221, 7
    %v223 = vsub.s32 0, %v222
    %v224 = vrot.slane %v219, %v223
    %v227 = vsel %vm140, %v214, 0
    %229 = vmatprep.subr.mxu0 0.0
    %230 = vmatpush1.msra.mxu0 %v215
    %231 = vmatprep.subr.mxu0 0.0
    %232 = vmatpush1.msra.mxu0 %v216
    %233 = vmatprep.subr.mxu0 0.0
    %234 = vmatpush1.msra.mxu0 %v217
    %235 = vmatprep.subr.mxu0 0.0
    %236 = vmatpush1.msra.mxu0 %v218
    %237 = vmatprep.subr.mxu0 0.0
    %238 = vmatpush1.msra.mxu0 0.0
    %239 = vmatprep.subr.mxu0 0.0
    %240 = vmatpush1.msra.mxu0 0.0
    %241 = vmatprep.subr.mxu0 0.0
    %242 = vmatpush1.msra.mxu0 0.0
    %243 = vmatprep.subr.mxu0 0.0
    %244 = vmatpush1.msra.mxu0 0.0
    %245 = vmatprep.subr.mxu0 0.0
    %246 = vmatpush1.msra.mxu0 0.0
    %247 = vmatprep.subr.mxu0 0.0
    %248 = vmatpush1.msra.mxu0 0.0
    %249 = vmatprep.subr.mxu0 0.0
    %250 = vmatpush1.msra.mxu0 0.0
    %251 = vmatprep.subr.mxu0 0.0
    %252 = vmatpush1.msra.mxu0 0.0
    %253 = vmatprep.subr.mxu0 0.0
    %254 = vmatpush1.msra.mxu0 0.0
    %255 = vmatprep.subr.mxu0 0.0
    %256 = vmatpush1.msra.mxu0 0.0
    %257 = vmatprep.subr.mxu0 0.0
    %258 = vmatpush1.msra.mxu0 0.0
    %259 = vmatprep.subr.mxu0 0.0
    %260 = vmatpush1.msra.mxu0 0.0
    %261 = vmatprep.subr.mxu0 0.0
    %262 = vmatpush1.msra.mxu0 0.0
    %263 = vmatprep.subr.mxu0 0.0
    %264 = vmatpush1.msra.mxu0 0.0
    %265 = vmatprep.subr.mxu0 0.0
    %266 = vmatpush1.msra.mxu0 0.0
    %267 = vmatprep.subr.mxu0 0.0
    %268 = vmatpush1.msra.mxu0 0.0
    %269 = vmatprep.subr.mxu0 0.0
    %270 = vmatpush1.msra.mxu0 0.0
    %271 = vmatprep.subr.mxu0 0.0
    %272 = vmatpush1.msra.mxu0 0.0
    %273 = vmatprep.subr.mxu0 0.0
    %274 = vmatpush1.msra.mxu0 0.0
    %275 = vmatprep.subr.mxu0 0.0
    %276 = vmatpush1.msra.mxu0 0.0
    %277 = vmatprep.subr.mxu0 0.0
    %278 = vmatpush1.msra.mxu0 0.0
    %279 = vmatprep.subr.mxu0 0.0
    %280 = vmatpush1.msra.mxu0 0.0
    %281 = vmatprep.subr.mxu0 0.0
    %282 = vmatpush1.msra.mxu0 0.0
    %283 = vmatprep.subr.mxu0 0.0
    %284 = vmatpush1.msra.mxu0 0.0
    %285 = vmatprep.subr.mxu0 0.0
    %286 = vmatpush1.msra.mxu0 0.0
    %287 = vmatprep.subr.mxu0 0.0
    %288 = vmatpush1.msra.mxu0 0.0
    %289 = vmatprep.subr.mxu0 0.0
    %290 = vmatpush1.msra.mxu0 0.0
    %291 = vmatprep.subr.mxu0 0.0
    %292 = vmatpush1.msra.mxu0 0.0
    %293 = vmatprep.mubr.f32.mxu0 0.0
    %294 = vmatmul.mubr.f32.gmra.mrb[0].mxu0 %v227
    %v295 = vpop.f32.mrb[0].mxu0
    %v296 = vadd.f32 %v224, %v295
    %v297 = vpop.f32.mrb[0].mxu0
    %298 = vdwg.mxu0
    %v299 = vmax.f32 %v296, 0.0
    %v300 = vand.u32 2147483647, %v296
    %v301 = vsub.f32 0.0, %v300
    %v302 = vmul.f32 %v301, 1.442695
    %v303 = vpow.pop %v302
    %v304 = vadd.f32 %v303, 1.0
    %v305 = vlog2.pop %v304
    %v306 = vmul.f32 %v305, 0.6931472
    %v307 = vmul.f32 -0.5, %v303
    %v308 = vadd.f32 %v307, 1.0
    %v309 = vmul.f32 %v308, %v303
    %v310 = vand.u32 2147483647, %v303
    %vm311 = vcmp.lt.f32.partialorder %v310, 0.0004427343
    %v312 = vsel %vm311, %v309, %v306
    %v313 = vadd.f32 %v299, %v312
    %v314 = vadd.f32 %v313, 1e-05
    %v315 = vrsqrt.pop %v314
    %v316 = vmul.f32 %v314, %v315
    %vm317 = vcmp.eq.f32.partialorder %v314, inf
    %v318 = vsel %vm317, %v314, %v316
    %vm319 = vcmp.eq.f32.partialorder %v314, 0.0
    %v320 = vand.u32 %v314, 2147483648
    %v321 = vsel %vm319, %v320, %v318
    %323 = vrot.lane.b32.xlu0 %v321, 8
    %v324 = vpop.permute.xlu0 %323
    %v326 = vmul.f32 %v44, %v324
    %328 = vrot.lane.b32.xlu0 %v326, 112
    %v329 = vpop.permute.xlu0 %328
    %v331 = vadd.f32 %v296, %v329
    %v332 = vlog2.pop %v314
    %v333 = vmul.f32 %v332, 0.6931472
    %v334 = vmul.f32 %v44, %v44
    %336 = vrot.lane.b32.xlu0 %v334, 120
    %v337 = vpop.permute.xlu0 %336
    %v339 = vadd.f32 %v333, %v337
    %341 = vrot.lane.b32.xlu0 %v339, 120
    %v342 = vpop.permute.xlu0 %341
    %vm344 = vcmask 64512
    %v345 = vsel %vm344, %v342, 0.0
    %346 = vadd.xlane.f32.xlu0 %v345
    %v347 = vpop.xlane.xlu0 %346
    %v348 = vadd.f32 %v347, 14.703016
    %v349 = vmul.f32 %v348, -0.5
    %350 = vst.msk [vmem:[#allocation5] sm:$0xff] %vm344, %v331
    %351 = vst.msk [vmem:[#allocation6] sm:$0xff] %vm344, %v296
    %353 = vrot.lane.b32.xlu0 %v314, 120
    %v354 = vpop.permute.xlu0 %353
    %356 = vst.msk [vmem:[#allocation8] sm:$0xff] %vm344, %v354
    %vm357 = vcmask 7168
    %358 = vst.msk [vmem:[%s10] sm:$0xff] %vm357, %v349
    // Predicated region
    $region34: #{tpu_custom_call.1} parent=1 // pred_check
      _
    $region35: #{tpu_custom_call.1} parent=1 // pred_check_branch
      %360 = sbr.rel (0) target = $region37
    $region36: #{tpu_custom_call.1} parent=1 // pred_region
      %s362 = ssub.s32 128, 128
      %363 = vsyncadd [#allocation4], %s362
      %s365 = sshll.u32 [#allocation5], 4
      %s366 = int_to_ptr.vmem [resolvable:$true] %s365
      %368 = dma.vmem_to_hbm [thread:$0]  %s366, 128, %s7, [#allocation4]
    $region37: #{tpu_custom_call.1} parent=1 // pred_fallthru
      _
    // Predicated region
    $region38: #{tpu_custom_call.1} parent=1 // pred_check
      _
    $region39: #{tpu_custom_call.1} parent=1 // pred_check_branch
      %370 = sbr.rel (0) target = $region41
    $region40: #{tpu_custom_call.1} parent=1 // pred_region
      %s372 = ssub.s32 128, 128
      %373 = vsyncadd [#allocation7], %s372
      %s375 = sshll.u32 [#allocation6], 4
      %s376 = int_to_ptr.vmem [resolvable:$true] %s375
      %378 = dma.vmem_to_hbm [thread:$0]  %s376, 128, %s8, [#allocation7]
    $region41: #{tpu_custom_call.1} parent=1 // pred_fallthru
      _
    // Predicated region
    $region42: #{tpu_custom_call.1} parent=1 // pred_check
      _
    $region43: #{tpu_custom_call.1} parent=1 // pred_check_branch
      %380 = sbr.rel (0) target = $region45
    $region44: #{tpu_custom_call.1} parent=1 // pred_region
      %s382 = ssub.s32 128, 128
      %383 = vsyncadd [#allocation7], %s382
      %s385 = sshll.u32 [#allocation8], 4
      %s386 = int_to_ptr.vmem [resolvable:$true] %s385
      %388 = dma.vmem_to_hbm [thread:$0]  %s386, 128, %s9, [#allocation7]
    $region45: #{tpu_custom_call.1} parent=1 // pred_fallthru
      _
    // Predicated region
    $region46: #{tpu_custom_call.1} parent=1 // pred_check
      _
    $region47: #{tpu_custom_call.1} parent=1 // pred_check_branch
      %390 = sbr.rel (0) target = $region49
    $region48: #{tpu_custom_call.1} parent=1 // pred_region
      _
    $region49: #{tpu_custom_call.1} parent=1 // pred_fallthru
      _
    // Predicated region
    $region50: #{tpu_custom_call.1} parent=1 // pred_check
      _
    $region51: #{tpu_custom_call.1} parent=1 // pred_check_branch
      %392 = sbr.rel (0) target = $region53
    $region52: #{tpu_custom_call.1} parent=1 // pred_region
      %393 = dma.done [#allocation4], 128
    $region53: #{tpu_custom_call.1} parent=1 // pred_fallthru
      _
    // Predicated region
    $region54: #{tpu_custom_call.1} parent=1 // pred_check
      _
    $region55: #{tpu_custom_call.1} parent=1 // pred_check_branch
      %395 = sbr.rel (0) target = $region57
    $region56: #{tpu_custom_call.1} parent=1 // pred_region
      %396 = dma.done [#allocation7], 128
    $region57: #{tpu_custom_call.1} parent=1 // pred_fallthru
      _
    // Predicated region
    $region58: #{tpu_custom_call.1} parent=1 // pred_check
      _
    $region59: #{tpu_custom_call.1} parent=1 // pred_check_branch
      %398 = sbr.rel (0) target = $region61
    $region60: #{tpu_custom_call.1} parent=1 // pred_region
      %399 = dma.done [#allocation7], 128
    $region61: #{tpu_custom_call.1} parent=1 // pred_fallthru
      _
    // Predicated region
    $region62: #{tpu_custom_call.1} parent=1 // pred_check
      _
    $region63: #{tpu_custom_call.1} parent=1 // pred_check_branch
      %401 = sbr.rel (0) target = $region65
    $region64: #{tpu_custom_call.1} parent=1 // pred_region
      _
    $region65: #{tpu_custom_call.1} parent=1 // pred_fallthru
      _
    %402 = vsyncpa [#allocation3], 1
    %403 = vsyncpa [#allocation4], 1
    %404 = vsyncpa [#allocation7], 1

</llo_original>
